<compile_context>
chip_gen: v6e
topology: v6e:2x2x1
jax: 0.10.0
libtpu: 0.0.40
codegen_flags: <defaults>
</compile_context>

<pallas_src>
import functools

import jax
import jax.numpy as jnp
from jax import lax
from jax.experimental import pallas as pl
from jax.experimental.pallas import tpu as pltpu


def _normalize(x, eps=1e-5):
    """PyTorch-style LayerNorm normalization (biased var, eps inside sqrt), no affine."""
    mean = jnp.mean(x, axis=-1, keepdims=True)
    xc = x - mean
    var = jnp.mean(xc * xc, axis=-1, keepdims=True)
    return xc * lax.rsqrt(var + eps)


def _layer_norm(x, gamma, beta, eps=1e-5):
    return _normalize(x, eps) * gamma + beta


def _vmem_limit_bytes():
    """Generation-aware VMEM budget: ~80% of capacity (v5e/v6e 128 MiB, v7x 64 MiB)."""
    try:
        cap = getattr(pltpu.get_tpu_info(), "vmem_capacity_bytes", None)
        if cap:
            return int(cap * 0.8)
    except Exception:
        pass
    return 48 * 1024 * 1024  # conservative fallback that also fits v7x


def mlp3_forward(x, params, *, block_s=512):
    """x: [stacked_dim, input_dim]; params in PyTorch layout (w: [out, in])."""
    s, d = x.shape
    h = params["w2"].shape[0]
    assert h == d // 2
    assert block_s % 128 == 0, "row tile must stay 128-aligned"

    bf16, f32 = jnp.bfloat16, jnp.float32

    # ---- one-time parameter glue (would be precomputed once in a real model) ----
    w1t = params["w1"].T.astype(bf16)                                  # [D, D]
    b1 = params["b1"].reshape(1, d).astype(f32)
    # Fold LN1's affine into fc2:  (n1*g1 + be1) @ W2^T + b2
    #   = n1 @ (g1[:,None] * W2^T) + (be1 @ W2^T + b2)
    w2t_f32 = params["w2"].T.astype(f32)                               # [D, H]
    w2t = (params["g1"][:, None] * w2t_f32).astype(bf16)               # [D, H]
    b2 = (params["b2"] + params["be1"] @ w2t_f32).reshape(1, h).astype(f32)

    # ---- stacked-axis tiling and 2-core split -----------------------------------
    if s <= block_s:
        ts, n_tiles = s, 1
    else:
        ts, n_tiles = block_s, pl.cdiv(s, block_s)
    n_split = 2 if n_tiles >= 2 else 1        # v7x megacore; harmless size-1 on v5e/v6e
    tps = pl.cdiv(n_tiles, n_split)           # tiles per split (serial reduction length)
    s_pad = n_split * tps * ts

    # fc3 weights as an f32 column, zero-padded so ragged / phantom tiles contribute 0.
    w3 = params["w3"].reshape(s, 1).astype(f32)
    if s_pad != s:
        w3 = jnp.pad(w3, ((0, s_pad - s), (0, 0)))

    def kernel(x_ref, w1_ref, b1_ref, w2_ref, b2_ref, w3_ref, o_ref):
        c = pl.program_id(0)        # core split   (parallel)
        i = pl.program_id(1)        # stacked tile (reduction -> "arbitrary")

        @pl.when(i == 0)
        def _init():
            o_ref[...] = jnp.zeros_like(o_ref)

        # Row mask: zero garbage rows of the ragged last tile (and phantom tiles)
        # BEFORE LN1 so no NaN/garbage can reach the reduction.
        row0 = (c * pl.num_programs(1) + i) * ts
        rows = row0 + lax.broadcasted_iota(jnp.int32, (ts, 1), 0)
        xv = jnp.where(rows < s, x_ref[...], 0.0).astype(jnp.bfloat16)

        # fc1 -> ReLU -> normalize (LN1 affine already folded into w2/b2).
        h1 = jnp.dot(xv, w1_ref[...], preferred_element_type=jnp.float32)
        n1 = _normalize(jnp.maximum(h1 + b1_ref[...], 0.0))

        # fc2 -> ReLU -> normalize (LN2 affine deferred to the XLA epilogue).
        h2 = jnp.dot(n1.astype(jnp.bfloat16), w2_ref[...],
                     preferred_element_type=jnp.float32)
        n2 = _normalize(jnp.maximum(h2 + b2_ref[...], 0.0))

        # fc3 partial sum over the stacked axis: f32 VPU multiply + sublane reduce
        # (off the MXU; an M=1 matmul would waste 255/256 of its rows).
        part = jnp.sum(w3_ref[...] * n2, axis=0, keepdims=True)        # [1, H] f32
        o_ref[...] += part.reshape(o_ref.shape)

    const_map = lambda c, i: (0, 0)
    resident = functools.partial(pl.BlockSpec, index_map=const_map,
                                 pipeline_mode=pl.Buffered(1))          # single-buffered
    # Phantom tiles (odd tile count split over 2 cores) clamp to the last real x tile;
    # their rows are fully masked in-kernel and their w3 entries are zero.
    x_tile_map = lambda c, i: (jnp.minimum(c * tps + i, n_tiles - 1), 0)

    flops = 2 * s_pad * (d * d + d * h + h) + 2 * h
    bytes_accessed = (x.size * 4 + w1t.size * 2 + w2t.size * 2 + w3.size * 4
                      + (b1.size + b2.size + n_split * h) * 4)

    partials = pl.pallas_call(
        kernel,
        out_shape=jax.ShapeDtypeStruct((n_split, 1, h), f32),
        grid_spec=pltpu.PrefetchScalarGridSpec(
            num_scalar_prefetch=0,
            grid=(n_split, tps),
            in_specs=[
                pl.BlockSpec((ts, d), x_tile_map),                     # x row tile (f32)
                resident((d, d)),                                      # w1^T  (bf16)
                resident((1, d)),                                      # b1
                resident((d, h)),                                      # g1-folded w2^T
                resident((1, h)),                                      # be1-folded b2
                pl.BlockSpec((ts, 1), lambda c, i: (c * tps + i, 0)),  # w3 column tile
            ],
            out_specs=pl.BlockSpec((1, 1, h), lambda c, i: (c, 0, 0)),
        ),
        compiler_params=pltpu.CompilerParams(
            # Core-split axis is parallel (v7x uses both TCs); the stacked-axis
            # reduction stays "arbitrary" within each core.
            dimension_semantics=("parallel", "arbitrary"),
            vmem_limit_bytes=_vmem_limit_bytes(),
        ),
        cost_estimate=pl.CostEstimate(
            flops=flops, transcendentals=2 * s_pad, bytes_accessed=bytes_accessed),
    )(x, w1t, b1, w2t, b2, w3)

    # Tiny XLA epilogue on [n_split, H]: combine core partials, re-apply LN2 affine
    # (acc*g2 + be2*sum(w3)), then fc3 bias + ReLU + out_linear.
    acc = jnp.sum(partials, axis=(0, 1))                               # [H]
    fc3_t = params["g2"] * acc + params["be2"] * jnp.sum(params["w3"]) + params["b3"]
    h3_t = jnp.maximum(fc3_t, 0.0)                                     # relu(fc3)^T
    out = jnp.dot(h3_t, params["wo"].reshape(h)) + params["bo"]
    return out.reshape(1, 1).astype(f32)


# ----------------------------- references ---------------------------------------
def reference_f32(x, p):
    """Faithful f32 mirror of the PyTorch module."""
    h1 = _layer_norm(jnp.maximum(x @ p["w1"].T + p["b1"], 0.0), p["g1"], p["be1"])
    h2 = _layer_norm(jnp.maximum(h1 @ p["w2"].T + p["b2"], 0.0), p["g2"], p["be2"])
    h3 = jnp.maximum(h2.T @ p["w3"].T + p["b3"], 0.0)                  # [H, 1]
    return h3.T @ p["wo"].T + p["bo"]                                  # [1, 1]


def reference_mixed(x, p):
    """Same math as the module, mirroring the kernel's mixed-precision strategy
    (bf16 MXU inputs for fc1/fc2, LN1 affine folded into fc2, rest in f32)."""
    bf16 = jnp.bfloat16
    h = p["w2"].shape[0]
    w1t = p["w1"].T.astype(bf16)
    w2t_f32 = p["w2"].T
    w2t = (p["g1"][:, None] * w2t_f32).astype(bf16)
    b2 = p["b2"] + p["be1"] @ w2t_f32
    h1 = jnp.maximum(jnp.dot(x.astype(bf16), w1t,
                             preferred_element_type=jnp.float32) + p["b1"], 0.0)
    n1 = _normalize(h1)
    h2 = jnp.maximum(jnp.dot(n1.astype(bf16), w2t,
                             preferred_element_type=jnp.float32) + b2, 0.0)
    n2 = _normalize(h2)
    acc = jnp.sum(p["w3"].reshape(-1, 1) * n2, axis=0)                 # [H]
    fc3_t = p["g2"] * acc + p["be2"] * jnp.sum(p["w3"]) + p["b3"]
    h3_t = jnp.maximum(fc3_t, 0.0)
    return (jnp.dot(h3_t, p["wo"].reshape(h)) + p["bo"]).reshape(1, 1)


def make_params(key, input_dim, stacked_dim):
    hid = input_dim // 2
    keys = jax.random.split(key, 6)

    def linear(k, out_f, in_f):
        bound = 1.0 / (in_f ** 0.5)
        kw, kb = jax.random.split(k)
        w = jax.random.uniform(kw, (out_f, in_f), jnp.float32, -bound, bound)
        b = jax.random.uniform(kb, (out_f,), jnp.float32, -bound, bound)
        return w, b

    w1, b1 = linear(keys[0], input_dim, input_dim)
    w2, b2 = linear(keys[1], hid, input_dim)
    w3, b3 = linear(keys[2], 1, stacked_dim)
    wo, bo = linear(keys[3], 1, hid)
    g1 = 1.0 + 0.1 * jax.random.normal(keys[4], (input_dim,), jnp.float32)
    g2 = 1.0 + 0.1 * jax.random.normal(keys[5], (hid,), jnp.float32)
    be1 = jnp.full((input_dim,), 0.05, jnp.float32)
    be2 = jnp.full((hid,), -0.05, jnp.float32)
    return dict(w1=w1, b1=b1, w2=w2, b2=b2, w3=w3, b3=b3, wo=wo, bo=bo,
                g1=g1, be1=be1, g2=g2, be2=be2)


if __name__ == "__main__":
    fwd = jax.jit(mlp3_forward, static_argnames=("block_s",))

    # Case 1: small shapes implied by the module (arrays: [stacked_dim, input_dim]).
    input_dim, stacked_dim = 32, 16
    kx, kp, k2 = jax.random.split(jax.random.PRNGKey(0), 3)
    x = jax.random.normal(kx, (stacked_dim, input_dim), jnp.float32)
    params = make_params(kp, input_dim, stacked_dim)

    out = jax.block_until_ready(fwd(x, params))
    assert out.shape == (1, 1)
    assert jnp.isfinite(out).all()
    assert jnp.allclose(out, reference_mixed(x, params), atol=1e-3, rtol=1e-2)
    assert jnp.allclose(out, reference_f32(x, params), atol=1e-1, rtol=1e-1)

    # Case 2: exercises the tiled reduction, the 2-way core split and the
    # ragged-last-tile row mask (block_s kept small only to hit those paths at
    # demo shapes; the production default is 512).
    input_dim2, stacked_dim2 = 128, 300
    k2x, k2p = jax.random.split(k2)
    x2 = jax.random.normal(k2x, (stacked_dim2, input_dim2), jnp.float32)
    params2 = make_params(k2p, input_dim2, stacked_dim2)
    out2 = jax.block_until_ready(fwd(x2, params2, block_s=128))
    assert jnp.isfinite(out2).all()
    assert jnp.allclose(out2, reference_mixed(x2, params2), atol=2e-3, rtol=2e-2)
    assert jnp.allclose(out2, reference_f32(x2, params2), atol=1e-1, rtol=1e-1)

    print("KERNEL_OK")
</pallas_src>

<mosaic_0001>
module attributes {stable_mosaic.version = 11 : i64} {
  func.func @kernel(%arg0: i32, %arg1: i32, %arg2: memref<16x32xf32, #tpu.memory_space<vmem>>, %arg3: memref<32x32xbf16, #tpu.memory_space<vmem>>, %arg4: memref<1x32xf32, #tpu.memory_space<vmem>>, %arg5: memref<32x16xbf16, #tpu.memory_space<vmem>>, %arg6: memref<1x16xf32, #tpu.memory_space<vmem>>, %arg7: memref<16x1xf32, #tpu.memory_space<vmem>>, %arg8: memref<1x1x16xf32, #tpu.memory_space<vmem>>) attributes {dimension_semantics = [#tpu.dimension_semantics<parallel>, #tpu.dimension_semantics<arbitrary>], iteration_bounds = array<i64: 1, 1>, scalar_prefetch = 0 : i64, scratch_operands = 0 : i64, tpu.core_type = #tpu.core_type<tc>, window_params = [{transform_indices = @transform_0, window_bounds = array<i64: 16, 32>}, {pipeline_mode = #tpu.pipeline_mode<synchronous>, transform_indices = @transform_1, window_bounds = array<i64: 32, 32>}, {pipeline_mode = #tpu.pipeline_mode<synchronous>, transform_indices = @transform_2, window_bounds = array<i64: 1, 32>}, {pipeline_mode = #tpu.pipeline_mode<synchronous>, transform_indices = @transform_3, window_bounds = array<i64: 32, 16>}, {pipeline_mode = #tpu.pipeline_mode<synchronous>, transform_indices = @transform_4, window_bounds = array<i64: 1, 16>}, {transform_indices = @transform_5, window_bounds = array<i64: 16, 1>}, {transform_indices = @transform_6, window_bounds = array<i64: 1, 1, 16>}]} {
    %c0_i32 = arith.constant 0 : i32
    %0 = arith.cmpi eq, %arg1, %c0_i32 : i32
    %1 = arith.extui %0 : i1 to i32
    %c0_i32_0 = arith.constant 0 : i32
    %2 = arith.cmpi ne, %1, %c0_i32_0 : i32
    scf.if %2 {
      %cst_34 = arith.constant 0.000000e+00 : f32
      %73 = vector.broadcast %cst_34 : f32 to vector<1x1x16xf32>
      %c0_35 = arith.constant 0 : index
      %c0_36 = arith.constant 0 : index
      %c0_37 = arith.constant 0 : index
      %74 = vector.load %arg8[%c0_35, %c0_36, %c0_37] : memref<1x1x16xf32, #tpu.memory_space<vmem>>, vector<1x1x16xf32>
      tpu.vector_store %arg8[%c0_35, %c0_36, %c0_37], %73 {strides = array<i32>} : memref<1x1x16xf32, #tpu.memory_space<vmem>>, vector<1x1x16xf32>,
    } else {
    }
    %c1_i32 = arith.constant 1 : i32
    %3 = arith.muli %arg0, %c1_i32 : i32
    %4 = arith.addi %3, %arg1 : i32
    %c16_i32 = arith.constant 16 : i32
    %5 = arith.muli %4, %c16_i32 : i32
    %6 = tpu.iota {dimensions = array<i32: 0>} : vector<16x1xi32>
    %7 = vector.broadcast %5 : i32 to vector<16x1xi32>
    %8 = arith.addi %7, %6 : vector<16x1xi32>
    %c16_i32_1 = arith.constant 16 : i32
    %9 = vector.broadcast %c16_i32_1 : i32 to vector<16x1xi32>
    %10 = arith.cmpi slt, %8, %9 : vector<16x1xi32>
    %c0 = arith.constant 0 : index
    %c0_2 = arith.constant 0 : index
    %11 = vector.load %arg2[%c0, %c0_2] : memref<16x32xf32, #tpu.memory_space<vmem>>, vector<16x32xf32>
    %cst = arith.constant 0.000000e+00 : f32
    %12 = vector.shape_cast %10 : vector<16x1xi1> to vector<16x1xi1>
    %13 = vector.broadcast %12 : vector<16x1xi1> to vector<16x32xi1>
    %14 = vector.broadcast %cst : f32 to vector<16x32xf32>
    %15 = arith.select %13, %11, %14 : vector<16x32xi1>, vector<16x32xf32>
    %16 = arith.truncf %15 : vector<16x32xf32> to vector<16x32xbf16>
    %c0_3 = arith.constant 0 : index
    %c0_4 = arith.constant 0 : index
    %17 = vector.load %arg3[%c0_3, %c0_4] : memref<32x32xbf16, #tpu.memory_space<vmem>>, vector<32x32xbf16>
    %cst_5 = arith.constant dense<0.000000e+00> : vector<16x32xf32>
    %18 = tpu.matmul %16, %17, %cst_5 {dimension_numbers = #tpu.dot_dimension_numbers<[1], [0], [0], [1], [0, 0, 1, 1], [], []>} : vector<16x32xbf16>, vector<32x32xbf16>, vector<16x32xf32> -> vector<16x32xf32>
    %c0_6 = arith.constant 0 : index
    %c0_7 = arith.constant 0 : index
    %19 = vector.load %arg4[%c0_6, %c0_7] : memref<1x32xf32, #tpu.memory_space<vmem>>, vector<1x32xf32>
    %20 = vector.broadcast %19 : vector<1x32xf32> to vector<16x32xf32>
    %21 = arith.addf %18, %20 : vector<16x32xf32>
    %cst_8 = arith.constant 0.000000e+00 : f32
    %22 = vector.broadcast %cst_8 : f32 to vector<16x32xf32>
    %23 = arith.maximumf %21, %22 : vector<16x32xf32>
    %cst_9 = arith.constant dense<0.000000e+00> : vector<16xf32>
    %24 = vector.multi_reduction <add>, %23, %cst_9 [1] : vector<16x32xf32> to vector<16xf32>
    %25 = vector.shape_cast %24 : vector<16xf32> to vector<16x1xf32>
    %cst_10 = arith.constant 3.200000e+01 : f32
    %26 = vector.broadcast %cst_10 : f32 to vector<16x1xf32>
    %27 = arith.divf %25, %26 : vector<16x1xf32>
    %28 = vector.broadcast %27 : vector<16x1xf32> to vector<16x32xf32>
    %29 = arith.subf %23, %28 : vector<16x32xf32>
    %30 = arith.mulf %29, %29 : vector<16x32xf32>
    %cst_11 = arith.constant dense<0.000000e+00> : vector<16xf32>
    %31 = vector.multi_reduction <add>, %30, %cst_11 [1] : vector<16x32xf32> to vector<16xf32>
    %32 = vector.shape_cast %31 : vector<16xf32> to vector<16x1xf32>
    %cst_12 = arith.constant 3.200000e+01 : f32
    %33 = vector.broadcast %cst_12 : f32 to vector<16x1xf32>
    %34 = arith.divf %32, %33 : vector<16x1xf32>
    %cst_13 = arith.constant 9.99999974E-6 : f32
    %35 = vector.broadcast %cst_13 : f32 to vector<16x1xf32>
    %36 = arith.addf %34, %35 : vector<16x1xf32>
    %37 = math.rsqrt %36 : vector<16x1xf32>
    %38 = vector.broadcast %37 : vector<16x1xf32> to vector<16x32xf32>
    %39 = arith.mulf %29, %38 : vector<16x32xf32>
    %40 = arith.truncf %39 : vector<16x32xf32> to vector<16x32xbf16>
    %c0_14 = arith.constant 0 : index
    %c0_15 = arith.constant 0 : index
    %41 = vector.load %arg5[%c0_14, %c0_15] : memref<32x16xbf16, #tpu.memory_space<vmem>>, vector<32x16xbf16>
    %cst_16 = arith.constant dense<0.000000e+00> : vector<16x16xf32>
    %42 = tpu.matmul %40, %41, %cst_16 {dimension_numbers = #tpu.dot_dimension_numbers<[1], [0], [0], [1], [0, 0, 1, 1], [], []>} : vector<16x32xbf16>, vector<32x16xbf16>, vector<16x16xf32> -> vector<16x16xf32>
    %c0_17 = arith.constant 0 : index
    %c0_18 = arith.constant 0 : index
    %43 = vector.load %arg6[%c0_17, %c0_18] : memref<1x16xf32, #tpu.memory_space<vmem>>, vector<1x16xf32>
    %44 = vector.broadcast %43 : vector<1x16xf32> to vector<16x16xf32>
    %45 = arith.addf %42, %44 : vector<16x16xf32>
    %cst_19 = arith.constant 0.000000e+00 : f32
    %46 = vector.broadcast %cst_19 : f32 to vector<16x16xf32>
    %47 = arith.maximumf %45, %46 : vector<16x16xf32>
    %cst_20 = arith.constant dense<0.000000e+00> : vector<16xf32>
    %48 = vector.multi_reduction <add>, %47, %cst_20 [1] : vector<16x16xf32> to vector<16xf32>
    %49 = vector.shape_cast %48 : vector<16xf32> to vector<16x1xf32>
    %cst_21 = arith.constant 1.600000e+01 : f32
    %50 = vector.broadcast %cst_21 : f32 to vector<16x1xf32>
    %51 = arith.divf %49, %50 : vector<16x1xf32>
    %52 = vector.broadcast %51 : vector<16x1xf32> to vector<16x16xf32>
    %53 = arith.subf %47, %52 : vector<16x16xf32>
    %54 = arith.mulf %53, %53 : vector<16x16xf32>
    %cst_22 = arith.constant dense<0.000000e+00> : vector<16xf32>
    %55 = vector.multi_reduction <add>, %54, %cst_22 [1] : vector<16x16xf32> to vector<16xf32>
    %56 = vector.shape_cast %55 : vector<16xf32> to vector<16x1xf32>
    %cst_23 = arith.constant 1.600000e+01 : f32
    %57 = vector.broadcast %cst_23 : f32 to vector<16x1xf32>
    %58 = arith.divf %56, %57 : vector<16x1xf32>
    %cst_24 = arith.constant 9.99999974E-6 : f32
    %59 = vector.broadcast %cst_24 : f32 to vector<16x1xf32>
    %60 = arith.addf %58, %59 : vector<16x1xf32>
    %61 = math.rsqrt %60 : vector<16x1xf32>
    %62 = vector.broadcast %61 : vector<16x1xf32> to vector<16x16xf32>
    %63 = arith.mulf %53, %62 : vector<16x16xf32>
    %c0_25 = arith.constant 0 : index
    %c0_26 = arith.constant 0 : index
    %64 = vector.load %arg7[%c0_25, %c0_26] : memref<16x1xf32, #tpu.memory_space<vmem>>, vector<16x1xf32>
    %65 = vector.broadcast %64 : vector<16x1xf32> to vector<16x16xf32>
    %66 = arith.mulf %65, %63 : vector<16x16xf32>
    %cst_27 = arith.constant dense<0.000000e+00> : vector<16xf32>
    %67 = vector.multi_reduction <add>, %66, %cst_27 [0] : vector<16x16xf32> to vector<16xf32>
    %68 = vector.shape_cast %67 : vector<16xf32> to vector<1x16xf32>
    %c0_28 = arith.constant 0 : index
    %c0_29 = arith.constant 0 : index
    %c0_30 = arith.constant 0 : index
    %69 = vector.load %arg8[%c0_28, %c0_29, %c0_30] : memref<1x1x16xf32, #tpu.memory_space<vmem>>, vector<1x1x16xf32>
    %70 = vector.shape_cast %68 : vector<1x16xf32> to vector<1x1x16xf32>
    %71 = arith.addf %69, %70 : vector<1x1x16xf32>
    %c0_31 = arith.constant 0 : index
    %c0_32 = arith.constant 0 : index
    %c0_33 = arith.constant 0 : index
    %72 = vector.load %arg8[%c0_31, %c0_32, %c0_33] : memref<1x1x16xf32, #tpu.memory_space<vmem>>, vector<1x1x16xf32>
    tpu.vector_store %arg8[%c0_31, %c0_32, %c0_33], %71 {strides = array<i32>} : memref<1x1x16xf32, #tpu.memory_space<vmem>>, vector<1x1x16xf32>,
    return
  }
  func.func @transform_0(%arg0: i32, %arg1: i32) -> (i32, i32) {
    %c1_i32 = arith.constant 1 : i32
    %0 = arith.muli %arg0, %c1_i32 : i32
    %1 = arith.addi %0, %arg1 : i32
    %c0_i32 = arith.constant 0 : i32
    %2 = arith.minsi %1, %c0_i32 : i32
    %c0_i32_0 = arith.constant 0 : i32
    %c0_i32_1 = arith.constant 0 : i32
    return %2, %c0_i32_0 : i32, i32
  }
  func.func @transform_1(%arg0: i32, %arg1: i32) -> (i32, i32) {
    %c0_i32 = arith.constant 0 : i32
    %c0_i32_0 = arith.constant 0 : i32
    %c0_i32_1 = arith.constant 0 : i32
    return %c0_i32, %c0_i32_0 : i32, i32
  }
  func.func @transform_2(%arg0: i32, %arg1: i32) -> (i32, i32) {
    %c0_i32 = arith.constant 0 : i32
    %c0_i32_0 = arith.constant 0 : i32
    %c0_i32_1 = arith.constant 0 : i32
    return %c0_i32, %c0_i32_0 : i32, i32
  }
  func.func @transform_3(%arg0: i32, %arg1: i32) -> (i32, i32) {
    %c0_i32 = arith.constant 0 : i32
    %c0_i32_0 = arith.constant 0 : i32
    %c0_i32_1 = arith.constant 0 : i32
    return %c0_i32, %c0_i32_0 : i32, i32
  }
  func.func @transform_4(%arg0: i32, %arg1: i32) -> (i32, i32) {
    %c0_i32 = arith.constant 0 : i32
    %c0_i32_0 = arith.constant 0 : i32
    %c0_i32_1 = arith.constant 0 : i32
    return %c0_i32, %c0_i32_0 : i32, i32
  }
  func.func @transform_5(%arg0: i32, %arg1: i32) -> (i32, i32) {
    %c1_i32 = arith.constant 1 : i32
    %0 = arith.muli %arg0, %c1_i32 : i32
    %1 = arith.addi %0, %arg1 : i32
    %c0_i32 = arith.constant 0 : i32
    %c0_i32_0 = arith.constant 0 : i32
    return %1, %c0_i32 : i32, i32
  }
  func.func @transform_6(%arg0: i32, %arg1: i32) -> (i32, i32, i32) {
    %c0_i32 = arith.constant 0 : i32
    %c0_i32_0 = arith.constant 0 : i32
    %c0_i32_1 = arith.constant 0 : i32
    return %arg0, %c0_i32, %c0_i32_0 : i32, i32, i32
  }
}

</mosaic_0001>

<llo_original>
// kernel: mlp3_forward.1
$region0: #{mlp3_forward.1}
  #allocation0 [shape = 'u32[]', space=smem, size = 0x4, offset = 0x4, fixed_abs, tag = 'smem constant byte address 0x4 - core index']
  #allocation1 [shape = 'u32[144,128]{1,0:T(1,128)}', space=vmem, size = 0x12000, scoped, tag = 'internal scratch']
  %s0 = inlined_call_operand.vmem [shape: f32[16,32], index: 0, kind: input, shape index: {}]
  %s1 = inlined_call_operand.vmem [shape: bf16[32,32], index: 1, kind: input, shape index: {}]
  %s2 = inlined_call_operand.vmem [shape: f32[1,32], index: 2, kind: input, shape index: {}]
  %s3 = inlined_call_operand.vmem [shape: bf16[32,16], index: 3, kind: input, shape index: {}]
  %s4 = inlined_call_operand.vmem [shape: f32[1,16], index: 4, kind: input, shape index: {}]
  %s5 = inlined_call_operand.vmem [shape: f32[16,1], index: 5, kind: input, shape index: {}]
  %s6 = inlined_call_operand.vmem [shape: f32[1,1,16], index: 6, kind: output, shape index: {}]
  %s7 = sld [smem:[#allocation0]]
  $region38: #{mlp3_forward.1} parent=0
    _
  %s9 = ssub.s32 1, %s7
  %s10 = scalar_select 0, %s9, %s7
  // Predicated region
  $region2: #{mlp3_forward.1} parent=0 // pred_check
    _
  $region3: #{mlp3_forward.1} parent=0 // pred_check_branch
    %12 = sbr.rel (0) target = $region5
  $region4: #{mlp3_forward.1} parent=0 // pred_region
    %s13 = sadd.s32 0, 0
    %p14 = scmp.lt.s32.totalorder %s13, 0
    %s15 = scalar_select %p14, %s13, 0
    %s16 = smul.u32 2, %s15
    %p17 = scmp.lt.s32.totalorder %s16, 1
    %s18 = scalar_select %p17, %s16, 1
    %s19 = smul.addr %s18, 8
    %s20 = scalar_lea.vmem %s0, %s19
    %s21 = sadd.s32 0, 0
    %p22 = scmp.lt.s32.totalorder %s21, 0
    %s23 = scalar_select %p22, %s21, 0
    %s24 = smul.u32 2, %s23
  $region5: #{mlp3_forward.1} parent=0 // pred_fallthru
    _
  // Predicated region
  $region6: #{mlp3_forward.1} parent=0 // pred_check
    _
  $region7: #{mlp3_forward.1} parent=0 // pred_check_branch
    %26 = sbr.rel (0) target = $region9
  $region8: #{mlp3_forward.1} parent=0 // pred_region
    _
  $region9: #{mlp3_forward.1} parent=0 // pred_fallthru
    _
  // Predicated region
  $region10: #{mlp3_forward.1} parent=0 // pred_check
    _
  $region11: #{mlp3_forward.1} parent=0 // pred_check_branch
    %28 = sbr.rel (0) target = $region13
  $region12: #{mlp3_forward.1} parent=0 // pred_region
    _
  $region13: #{mlp3_forward.1} parent=0 // pred_fallthru
    _
  // Predicated region
  $region14: #{mlp3_forward.1} parent=0 // pred_check
    _
  $region15: #{mlp3_forward.1} parent=0 // pred_check_branch
    %30 = sbr.rel (0) target = $region17
  $region16: #{mlp3_forward.1} parent=0 // pred_region
    _
  $region17: #{mlp3_forward.1} parent=0 // pred_fallthru
    _
  // Predicated region
  $region18: #{mlp3_forward.1} parent=0 // pred_check
    _
  $region19: #{mlp3_forward.1} parent=0 // pred_check_branch
    %32 = sbr.rel (0) target = $region21
  $region20: #{mlp3_forward.1} parent=0 // pred_region
    _
  $region21: #{mlp3_forward.1} parent=0 // pred_fallthru
    _
  // Predicated region
  $region22: #{mlp3_forward.1} parent=0 // pred_check
    _
  $region23: #{mlp3_forward.1} parent=0 // pred_check_branch
    %34 = sbr.rel (0) target = $region25
  $region24: #{mlp3_forward.1} parent=0 // pred_region
    %s35 = sadd.s32 0, 0
    %s36 = smul.u32 2, %s35
    %p37 = scmp.lt.s32.totalorder %s36, 1
    %s38 = scalar_select %p37, %s36, 1
    %s39 = smul.addr %s38, 8
    %s40 = scalar_lea.vmem %s5, %s39
    %s41 = sadd.s32 0, 0
    %s42 = smul.u32 2, %s41
  $region25: #{mlp3_forward.1} parent=0 // pred_fallthru
    _
  %s43 = sadd.s32 0, 0
  %p44 = scmp.lt.s32.totalorder %s43, 0
  %s45 = scalar_select %p44, %s43, 0
  %s46 = smul.u32 2, %s45
  %p47 = scmp.lt.s32.totalorder %s46, 1
  %s48 = scalar_select %p47, %s46, 1
  %s49 = smul.addr %s48, 8
  %s50 = scalar_lea.vmem %s0, %s49
  %s51 = sadd.s32 0, 0
  %s52 = smul.u32 2, %s51
  %p53 = scmp.lt.s32.totalorder %s52, 1
  %s54 = scalar_select %p53, %s52, 1
  %s55 = smul.addr %s54, 8
  %s56 = scalar_lea.vmem %s5, %s55
  %s57 = sadd.s32 0, 0
  %p58 = scmp.lt.s32.totalorder %s57, 0
  %s59 = scalar_select %p58, %s57, 0
  %s60 = smul.u32 2, %s59
  %p61 = scmp.lt.s32.totalorder %s60, 1
  %s62 = scalar_select %p61, %s60, 1
  %s63 = smul.addr %s62, 8
  %s64 = scalar_lea.vmem %s0, %s63
  %s65 = sadd.s32 0, 0
  %p66 = scmp.lt.s32.totalorder %s65, 0
  %s67 = scalar_select %p66, %s65, 0
  %s68 = smul.u32 2, %s67
  %s69 = sadd.s32 0, 0
  %s70 = smul.u32 2, %s69
  %p71 = scmp.lt.s32.totalorder %s70, 1
  %s72 = scalar_select %p71, %s70, 1
  %s73 = smul.addr %s72, 8
  %s74 = scalar_lea.vmem %s5, %s73
  %s75 = sadd.s32 0, 0
  %s76 = smul.u32 2, %s75
  %p78 = scmp.eq.s32.totalorder 0, 0
  // Predicated region
  $region26: #{mlp3_forward.1} parent=0 // pred_check
    %p79 = pneg %p78
  $region27: #{mlp3_forward.1} parent=0 // pred_check_branch
    %81 = sbr.rel (%p79) target = $region29
  $region28: #{mlp3_forward.1} parent=0 // pred_region
    %vm82 = vcmask 122880
    %83 = vst.msk [vmem:[%s6] sm:$0x1] %vm82, 0.0
  $region29: #{mlp3_forward.1} parent=0 // pred_fallthru
    _
  %s84 = sadd.s32 0, 0
  %s85 = smul.u32 %s84, 16
  %v86 = vlaneseq
  %v87 = vshrl.u32 %v86, 7
  %v88 = vadd.s32 %v87, 8
  %v89 = vstv %s85
  %v90 = vadd.s32 %v89, %v87
  %v91 = vadd.s32 %v89, %v88
  %vm92 = vcmp.lt.s32.totalorder %v90, 16
  %vm93 = vcmp.lt.s32.totalorder %v91, 16
  %v94 = vld [vmem:[%s64] sm:$0xff]
  %v95 = vld [vmem:[%s64 + $0x8] sm:$0xff]
  %v96 = vsel %vm92, 1, 0
  %v97 = vsel %vm93, 1, 0
  %vm98 = vcmp.eq.s32.totalorder %v96, 1
  %vm99 = vcmp.eq.s32.totalorder %v97, 1
  %v100 = vsel %vm98, %v94, 0.0
  %v101 = vsel %vm99, %v95, 0.0
  %v102 = vpack.c.bf16 %v101, %v100
  %v103 = vld [vmem:[%s1] sm:$0xf]
  %v104 = vld [vmem:[%s1 + $0x4] sm:$0xf]
  %v105 = vld [vmem:[%s1 + $0x8] sm:$0xf]
  %v106 = vld [vmem:[%s1 + $0xc] sm:$0xf]
  %v107 = vld [vmem:[%s2] sm:$0x1]
  %v109 = vlaneseq
  %v110 = vshrl.u32 %v109, 7
  %v111 = vsub.s32 0, %v110
  %v112 = vrot.slane %v107, %v111
  %v118 = vunpack.c.l.b16 %v103
  %v119 = vunpack.c.l.b16 %v104
  %v120 = vunpack.c.l.b16 %v105
  %v121 = vunpack.c.l.b16 %v106
  %v122 = vpack.c.b16 %v119, %v118
  %v123 = vpack.c.b16 %v121, %v120
  %vm126 = vcmask 261120
  %v128 = vsel %vm126, %v102, 0
  %130 = vmatprep.subr.bf16.mxu0 0
  %131 = vmatpush1.bf16.msra.mxu0 0
  %132 = vmatprep.subr.bf16.mxu0 0
  %133 = vmatpush1.bf16.msra.mxu0 0
  %134 = vmatprep.subr.bf16.mxu0 0
  %135 = vmatpush1.bf16.msra.mxu0 0
  %136 = vmatprep.subr.bf16.mxu0 0
  %137 = vmatpush1.bf16.msra.mxu0 0
  %138 = vmatprep.subr.bf16.mxu0 0
  %139 = vmatpush1.bf16.msra.mxu0 0
  %140 = vmatprep.subr.bf16.mxu0 0
  %141 = vmatpush1.bf16.msra.mxu0 0
  %142 = vmatprep.subr.bf16.mxu0 0
  %143 = vmatpush1.bf16.msra.mxu0 %v123
  %144 = vmatprep.subr.bf16.mxu0 0
  %145 = vmatpush1.bf16.msra.mxu0 %v122
  %146 = vmatprep.subr.bf16.mxu0 0
  %147 = vmatpush2.bf16.msra.mxu0 0
  %148 = vmatprep.subr.bf16.mxu0 0
  %149 = vmatpush2.bf16.msra.mxu0 0
  %150 = vmatprep.subr.bf16.mxu0 0
  %151 = vmatpush2.bf16.msra.mxu0 0
  %152 = vmatprep.subr.bf16.mxu0 0
  %153 = vmatpush2.bf16.msra.mxu0 0
  %154 = vmatprep.subr.bf16.mxu0 0
  %155 = vmatpush2.bf16.msra.mxu0 0
  %156 = vmatprep.subr.bf16.mxu0 0
  %157 = vmatpush2.bf16.msra.mxu0 0
  %158 = vmatprep.subr.bf16.mxu0 0
  %159 = vmatpush2.bf16.msra.mxu0 0
  %160 = vmatprep.subr.bf16.mxu0 0
  %161 = vmatpush2.bf16.msra.mxu0 0
  %162 = vmatprep.mubr.bf16.mxu0 0
  %163 = vmatmul.mubr.bf16.gmra.mxu0 %v128
  %v164 = vpop.f32.mrf.mxu0
  %v165 = vadd.f32 %v112, %v164
  %v166 = vpop.f32.mrf.mxu0
  %v167 = vpop.f32.mrf.mxu0
  %v168 = vadd.f32 %v112, %v167
  %v169 = vpop.f32.mrf.mxu0
  %170 = vdwg.mxu0
  %v171 = vmax.f32 %v165, 0.0
  %v172 = vmax.f32 %v168, 0.0
  %v173 = vsel %vm126, %v171, 0.0
  %174 = vadd.xlane.f32.xlu0 %v173
  %v175 = vpop.xlane.xlu0 %174
  %v176 = vsel %vm126, %v172, 0.0
  %177 = vadd.xlane.f32.xlu0 %v176
  %v178 = vpop.xlane.xlu0 %177
  %v179 = vrcp.pop 32.0
  %v180 = vmul.f32 %v175, %v179
  %v181 = vmul.f32 %v178, %v179
  %v182 = vsub.f32 %v171, %v180
  %v183 = vsub.f32 %v172, %v181
  %v184 = vmul.f32 %v182, %v182
  %v185 = vmul.f32 %v183, %v183
  %v186 = vsel %vm126, %v184, 0.0
  %187 = vadd.xlane.f32.xlu0 %v186
  %v188 = vpop.xlane.xlu0 %187
  %v189 = vsel %vm126, %v185, 0.0
  %190 = vadd.xlane.f32.xlu0 %v189
  %v191 = vpop.xlane.xlu0 %190
  %v192 = vmul.f32 %v188, %v179
  %v193 = vmul.f32 %v191, %v179
  %v194 = vadd.f32 %v192, 1e-05
  %v195 = vadd.f32 %v193, 1e-05
  %v196 = vrsqrt.pop %v194
  %v197 = vrsqrt.pop %v195
  %v198 = vmul.f32 %v182, %v196
  %v199 = vmul.f32 %v183, %v197
  %v200 = vpack.c.bf16 %v199, %v198
  %v201 = vld [vmem:[%s3] sm:$0xf]
  %v202 = vld [vmem:[%s3 + $0x4] sm:$0xf]
  %v203 = vld [vmem:[%s3 + $0x8] sm:$0xf]
  %v204 = vld [vmem:[%s3 + $0xc] sm:$0xf]
  %v205 = vld [vmem:[%s4] sm:$0x1]
  %v207 = vlaneseq
  %v208 = vshrl.u32 %v207, 7
  %v209 = vsub.s32 0, %v208
  %v210 = vrot.slane %v205, %v209
  %v216 = vunpack.c.l.b16 %v201
  %v217 = vunpack.c.l.b16 %v202
  %v218 = vunpack.c.l.b16 %v203
  %v219 = vunpack.c.l.b16 %v204
  %v220 = vpack.c.b16 %v217, %v216
  %v221 = vpack.c.b16 %v219, %v218
  %v225 = vsel %vm126, %v200, 0
  %227 = vmatprep.subr.bf16.mxu0 0
  %228 = vmatpush1.bf16.msra.mxu0 0
  %229 = vmatprep.subr.bf16.mxu0 0
  %230 = vmatpush1.bf16.msra.mxu0 0
  %231 = vmatprep.subr.bf16.mxu0 0
  %232 = vmatpush1.bf16.msra.mxu0 0
  %233 = vmatprep.subr.bf16.mxu0 0
  %234 = vmatpush1.bf16.msra.mxu0 0
  %235 = vmatprep.subr.bf16.mxu0 0
  %236 = vmatpush1.bf16.msra.mxu0 0
  %237 = vmatprep.subr.bf16.mxu0 0
  %238 = vmatpush1.bf16.msra.mxu0 0
  %239 = vmatprep.subr.bf16.mxu0 0
  %240 = vmatpush1.bf16.msra.mxu0 %v221
  %241 = vmatprep.subr.bf16.mxu0 0
  %242 = vmatpush1.bf16.msra.mxu0 %v220
  %243 = vmatprep.subr.bf16.mxu0 0
  %244 = vmatpush2.bf16.msra.mxu0 0
  %245 = vmatprep.subr.bf16.mxu0 0
  %246 = vmatpush2.bf16.msra.mxu0 0
  %247 = vmatprep.subr.bf16.mxu0 0
  %248 = vmatpush2.bf16.msra.mxu0 0
  %249 = vmatprep.subr.bf16.mxu0 0
  %250 = vmatpush2.bf16.msra.mxu0 0
  %251 = vmatprep.subr.bf16.mxu0 0
  %252 = vmatpush2.bf16.msra.mxu0 0
  %253 = vmatprep.subr.bf16.mxu0 0
  %254 = vmatpush2.bf16.msra.mxu0 0
  %255 = vmatprep.subr.bf16.mxu0 0
  %256 = vmatpush2.bf16.msra.mxu0 0
  %257 = vmatprep.subr.bf16.mxu0 0
  %258 = vmatpush2.bf16.msra.mxu0 0
  %259 = vmatprep.mubr.bf16.mxu0 0
  %260 = vmatmul.mubr.bf16.gmra.mxu0 %v225
  %v261 = vpop.f32.mrf.mxu0
  %v262 = vadd.f32 %v210, %v261
  %v263 = vpop.f32.mrf.mxu0
  %v264 = vpop.f32.mrf.mxu0
  %v265 = vadd.f32 %v210, %v264
  %v266 = vpop.f32.mrf.mxu0
  %267 = vdwg.mxu0
  %v268 = vmax.f32 %v262, 0.0
  %v269 = vmax.f32 %v265, 0.0
  %vm270 = vcmask 130048
  %v271 = vsel %vm270, %v268, 0.0
  %272 = vadd.xlane.f32.xlu0 %v271
  %v273 = vpop.xlane.xlu0 %272
  %v274 = vsel %vm270, %v269, 0.0
  %275 = vadd.xlane.f32.xlu0 %v274
  %v276 = vpop.xlane.xlu0 %275
  %v277 = vrcp.pop 16.0
  %v278 = vmul.f32 %v273, %v277
  %v279 = vmul.f32 %v276, %v277
  %v280 = vsub.f32 %v268, %v278
  %v281 = vsub.f32 %v269, %v279
  %v282 = vmul.f32 %v280, %v280
  %v283 = vmul.f32 %v281, %v281
  %v284 = vsel %vm270, %v282, 0.0
  %285 = vadd.xlane.f32.xlu0 %v284
  %v286 = vpop.xlane.xlu0 %285
  %v287 = vsel %vm270, %v283, 0.0
  %288 = vadd.xlane.f32.xlu0 %v287
  %v289 = vpop.xlane.xlu0 %288
  %v290 = vmul.f32 %v286, %v277
  %v291 = vmul.f32 %v289, %v277
  %v292 = vadd.f32 %v290, 1e-05
  %v293 = vadd.f32 %v291, 1e-05
  %v294 = vrsqrt.pop %v292
  %v295 = vrsqrt.pop %v293
  %v296 = vmul.f32 %v280, %v294
  %v297 = vmul.f32 %v281, %v295
  %v298 = vld [vmem:[%s74] sm:$0xff]
  %v299 = vld [vmem:[%s74 + $0x8] sm:$0xff]
  %301 = vset.pattern.permute.xlu0 0
  %302 = vperm.xlu0 %301, %v298
  %v303 = vpop.permute.xlu0 %302
  %306 = vset.pattern.permute.xlu0 0
  %307 = vperm.xlu0 %306, %v299
  %v308 = vpop.permute.xlu0 %307
  %v310 = vmul.f32 %v303, %v296
  %v311 = vmul.f32 %v308, %v297
  %v312 = vsel %vm270, %v310, 0.0
  %v313 = vsel %vm270, %v311, 0.0
  %v314 = vadd.f32 %v312, %v313
  %v315 = vrot.slane %v314, 4
  %v316 = vadd.f32 %v314, %v315
  %v317 = vrot.slane %v316, 2
  %v318 = vadd.f32 %v316, %v317
  %v319 = vrot.slane %v318, 1
  %v320 = vadd.f32 %v318, %v319
  %v321 = vld [vmem:[%s6] sm:$0x1]
  %v322 = vadd.f32 %v321, %v320
  %vm323 = vcmask 122880
  %324 = vst.msk [vmem:[%s6] sm:$0x1] %vm323, %v322
  // Predicated region
  $region30: #{mlp3_forward.1} parent=0 // pred_check
    _
  $region31: #{mlp3_forward.1} parent=0 // pred_check_branch
    %326 = sbr.rel (0) target = $region33
  $region32: #{mlp3_forward.1} parent=0 // pred_region
    _
  $region33: #{mlp3_forward.1} parent=0 // pred_fallthru
    _
  // Predicated region
  $region34: #{mlp3_forward.1} parent=0 // pred_check
    _
  $region35: #{mlp3_forward.1} parent=0 // pred_check_branch
    %328 = sbr.rel (0) target = $region37
  $region36: #{mlp3_forward.1} parent=0 // pred_region
    _
  $region37: #{mlp3_forward.1} parent=0 // pred_fallthru
    _

</llo_original>
